<compile_context>
chip_gen: v7x
topology: tpu7x:2x2x1
jax: 0.10.0
libtpu: 0.0.40
codegen_flags: <defaults>
</compile_context>

<pallas_src>
import jax
import jax.numpy as jnp
from jax import lax
from jax.experimental import pallas as pl
from jax.experimental.pallas import tpu as pltpu


def _mlp_kernel(x_ref,
                w1_ref, b1_ref,
                w2_ref, b2_ref,
                w3_ref, b3_ref,
                w4_ref, b4_ref,
                w5_ref, b5_ref,
                o_ref):
    """Fused 5-layer MLP on one batch tile, feature-major activations.

    x_ref:  (tile, F)   f32
    w_i:    (out, in)   bf16 (PyTorch layout)
    b_i:    (out, 1)    f32
    o_ref:  (1, tile)   f32 (lane-dense output row)
    """
    xb = x_ref[...].astype(jnp.bfloat16)                       # (tile, F) bf16

    # Layer 1: (64, F) x (tile, F) contracted on F -> (64, tile).
    # Same "contract both on last dim" pattern as q @ k^T in flash attention,
    # so no explicit transpose of the x tile is needed.
    h = lax.dot_general(
        w1_ref[...], xb,
        dimension_numbers=(((1,), (1,)), ((), ())),
        preferred_element_type=jnp.float32)
    h = jnp.maximum(h + b1_ref[...], 0.0)                      # f32 VPU

    # Layers 2-4: W_i (out, in) @ h (in, tile) -> (out, tile).
    h = jnp.dot(w2_ref[...], h.astype(jnp.bfloat16),
                preferred_element_type=jnp.float32)
    h = jnp.maximum(h + b2_ref[...], 0.0)

    h = jnp.dot(w3_ref[...], h.astype(jnp.bfloat16),
                preferred_element_type=jnp.float32)
    h = jnp.maximum(h + b3_ref[...], 0.0)

    h = jnp.dot(w4_ref[...], h.astype(jnp.bfloat16),
                preferred_element_type=jnp.float32)
    h = jnp.maximum(h + b4_ref[...], 0.0)

    # Output layer: (1, 32) @ (32, tile) -> lane-dense (1, tile) row.
    out = jnp.dot(w5_ref[...], h.astype(jnp.bfloat16),
                  preferred_element_type=jnp.float32)
    o_ref[...] = (out + b5_ref[...]).astype(o_ref.dtype)


def _round_up(n, m):
    return ((n + m - 1) // m) * m


def mlp_forward(x, params, *, batch_tile=4096):
    """x: [B, F] float32 -> [B, 1] float32.

    Params are in PyTorch layout: w{i} (out, in), b{i} (out,).
    Weights are cast to bf16 once here (MXU operands); accumulation is f32.
    """
    assert batch_tile % 128 == 0 and batch_tile >= 128, \
        "batch_tile must be a positive multiple of 128 (lane width)"
    B, F = x.shape

    # Pad only to a multiple of 128 when the whole batch fits in one tile
    # (cheap); only batches bigger than one tile get padded to a tile multiple.
    B128 = _round_up(B, 128)
    tile = min(batch_tile, B128)
    B_pad = _round_up(B128, tile)
    if B_pad != B:
        x = jnp.pad(x, ((0, B_pad - B), (0, 0)))

    # Kernel-layout params: bf16 (out, in) weights, f32 (out, 1) biases.
    ws = [params[f"w{i}"].astype(jnp.bfloat16) for i in range(1, 6)]
    bs = [params[f"b{i}"].astype(jnp.float32).reshape(-1, 1) for i in range(1, 6)]

    grid = (B_pad // tile,)

    def full_spec(arr):
        # Weights/biases: tiny and fully VMEM-resident; same block every step.
        return pl.BlockSpec(arr.shape, lambda i: (0, 0))

    in_specs = [pl.BlockSpec((tile, F), lambda i: (i, 0))]      # x batch tile
    operands = []
    for w, b in zip(ws, bs):
        operands += [w, b]
        in_specs += [full_spec(w), full_spec(b)]

    # Advisory cost estimate.
    flops = 2 * B_pad * (F * 64 + 64 * 128 + 128 * 64 + 64 * 32 + 32 * 1)
    weight_bytes = sum(int(a.size) * a.dtype.itemsize for a in (*ws, *bs))
    bytes_accessed = B_pad * F * 4 + B_pad * 4 + weight_bytes

    out_row = pl.pallas_call(
        _mlp_kernel,
        out_shape=jax.ShapeDtypeStruct((1, B_pad), jnp.float32),
        grid_spec=pltpu.PrefetchScalarGridSpec(
            num_scalar_prefetch=0,
            grid=grid,
            in_specs=in_specs,
            out_specs=pl.BlockSpec((1, tile), lambda i: (0, i)),  # lane-dense
        ),
        compiler_params=pltpu.CompilerParams(
            dimension_semantics=("parallel",),
            # tile=4096 uses ~10 MiB (x double-buffer + feature-major
            # intermediates + weights); 32 MiB is safe on v5e/v6e/v7x.
            vmem_limit_bytes=32 * 1024 * 1024,
        ),
        cost_estimate=pl.CostEstimate(
            flops=flops, transcendentals=0, bytes_accessed=bytes_accessed),
    )(x, *operands)

    # (1, B_pad) lane-dense row -> (B, 1) column, dropping batch padding.
    return out_row.reshape(B_pad, 1)[:B]


def init_params(key, input_size):
    """Deterministic init matching nn.Linear: w (out, in), b (out,)."""
    dims = [(input_size, 64), (64, 128), (128, 64), (64, 32), (32, 1)]
    params = {}
    for idx, (fan_in, fan_out) in enumerate(dims, start=1):
        key, kw, kb = jax.random.split(key, 3)
        bound = 1.0 / (fan_in ** 0.5)   # PyTorch default U(-1/sqrt(in), 1/sqrt(in))
        params[f"w{idx}"] = jax.random.uniform(
            kw, (fan_out, fan_in), jnp.float32, -bound, bound)
        params[f"b{idx}"] = jax.random.uniform(
            kb, (fan_out,), jnp.float32, -bound, bound)
    return params


def reference_forward_f32(x, params):
    """Pure-JAX f32 reference (matches the PyTorch module exactly)."""
    h = x
    for i in range(1, 5):
        h = jnp.maximum(h @ params[f"w{i}"].T + params[f"b{i}"], 0.0)
    return h @ params["w5"].T + params["b5"]


def reference_forward_bf16(x, params):
    """Pure-JAX reference mirroring the kernel's precision:
    bf16 matmul operands, f32 accumulation, f32 bias add + ReLU."""
    h = x
    for i in range(1, 6):
        w = params[f"w{i}"].astype(jnp.bfloat16)
        h = jnp.dot(h.astype(jnp.bfloat16), w.T,
                    preferred_element_type=jnp.float32) + params[f"b{i}"]
        if i < 5:
            h = jnp.maximum(h, 0.0)
    return h


if __name__ == "__main__":
    key = jax.random.PRNGKey(0)
    k_x, k_p = jax.random.split(key)

    INPUT_SIZE = 16   # stand-in for X_train.shape[1]
    BATCH = 200       # not 128-aligned: exercises the (cheap) pad-to-128 path

    x = jax.random.normal(k_x, (BATCH, INPUT_SIZE), jnp.float32)
    params = init_params(k_p, INPUT_SIZE)

    out = jax.block_until_ready(mlp_forward(x, params))
    assert out.shape == (BATCH, 1)

    ref_bf16 = reference_forward_bf16(x, params)   # same operand precision
    ref_f32 = reference_forward_f32(x, params)     # exact PyTorch math
    assert jnp.allclose(out, ref_bf16, atol=1e-3, rtol=1e-3), \
        "mismatch vs bf16-operand reference"
    assert jnp.allclose(out, ref_f32, atol=5e-2, rtol=5e-2), \
        "mismatch vs f32 reference"

    # Also exercise a multi-step grid (tile smaller than the padded batch).
    out_multi = jax.block_until_ready(mlp_forward(x, params, batch_tile=128))
    assert jnp.allclose(out_multi, out, atol=1e-5, rtol=1e-5)

    print("KERNEL_OK")
</pallas_src>

<mosaic_0001>
module attributes {stable_mosaic.version = 11 : i64} {
  func.func @_mlp_kernel(%arg0: i32, %arg1: memref<256x16xf32, #tpu.memory_space<vmem>>, %arg2: memref<64x16xbf16, #tpu.memory_space<vmem>>, %arg3: memref<64x1xf32, #tpu.memory_space<vmem>>, %arg4: memref<128x64xbf16, #tpu.memory_space<vmem>>, %arg5: memref<128x1xf32, #tpu.memory_space<vmem>>, %arg6: memref<64x128xbf16, #tpu.memory_space<vmem>>, %arg7: memref<64x1xf32, #tpu.memory_space<vmem>>, %arg8: memref<32x64xbf16, #tpu.memory_space<vmem>>, %arg9: memref<32x1xf32, #tpu.memory_space<vmem>>, %arg10: memref<1x32xbf16, #tpu.memory_space<vmem>>, %arg11: memref<1x1xf32, #tpu.memory_space<vmem>>, %arg12: memref<1x256xf32, #tpu.memory_space<vmem>>) attributes {dimension_semantics = [#tpu.dimension_semantics<parallel>], iteration_bounds = array<i64: 1>, scalar_prefetch = 0 : i64, scratch_operands = 0 : i64, tpu.core_type = #tpu.core_type<tc>, window_params = [{transform_indices = @transform_0, window_bounds = array<i64: 256, 16>}, {pipeline_mode = #tpu.pipeline_mode<synchronous>, transform_indices = @transform_1, window_bounds = array<i64: 64, 16>}, {pipeline_mode = #tpu.pipeline_mode<synchronous>, transform_indices = @transform_2, window_bounds = array<i64: 64, 1>}, {pipeline_mode = #tpu.pipeline_mode<synchronous>, transform_indices = @transform_3, window_bounds = array<i64: 128, 64>}, {pipeline_mode = #tpu.pipeline_mode<synchronous>, transform_indices = @transform_4, window_bounds = array<i64: 128, 1>}, {pipeline_mode = #tpu.pipeline_mode<synchronous>, transform_indices = @transform_5, window_bounds = array<i64: 64, 128>}, {pipeline_mode = #tpu.pipeline_mode<synchronous>, transform_indices = @transform_6, window_bounds = array<i64: 64, 1>}, {pipeline_mode = #tpu.pipeline_mode<synchronous>, transform_indices = @transform_7, window_bounds = array<i64: 32, 64>}, {pipeline_mode = #tpu.pipeline_mode<synchronous>, transform_indices = @transform_8, window_bounds = array<i64: 32, 1>}, {pipeline_mode = #tpu.pipeline_mode<synchronous>, transform_indices = @transform_9, window_bounds = array<i64: 1, 32>}, {pipeline_mode = #tpu.pipeline_mode<synchronous>, transform_indices = @transform_10, window_bounds = array<i64: 1, 1>}, {transform_indices = @transform_11, window_bounds = array<i64: 1, 256>}]} {
    %c0 = arith.constant 0 : index
    %c0_0 = arith.constant 0 : index
    %0 = vector.load %arg1[%c0, %c0_0] : memref<256x16xf32, #tpu.memory_space<vmem>>, vector<256x16xf32>
    %1 = arith.truncf %0 : vector<256x16xf32> to vector<256x16xbf16>
    %c0_1 = arith.constant 0 : index
    %c0_2 = arith.constant 0 : index
    %2 = vector.load %arg2[%c0_1, %c0_2] : memref<64x16xbf16, #tpu.memory_space<vmem>>, vector<64x16xbf16>
    %cst = arith.constant dense<0.000000e+00> : vector<64x256xf32>
    %3 = tpu.matmul %2, %1, %cst {dimension_numbers = #tpu.dot_dimension_numbers<[1], [1], [0], [0], [0, 0, 1, 0], [], []>} : vector<64x16xbf16>, vector<256x16xbf16>, vector<64x256xf32> -> vector<64x256xf32>
    %c0_3 = arith.constant 0 : index
    %c0_4 = arith.constant 0 : index
    %4 = vector.load %arg3[%c0_3, %c0_4] : memref<64x1xf32, #tpu.memory_space<vmem>>, vector<64x1xf32>
    %5 = vector.broadcast %4 : vector<64x1xf32> to vector<64x256xf32>
    %6 = arith.addf %3, %5 : vector<64x256xf32>
    %cst_5 = arith.constant 0.000000e+00 : f32
    %7 = vector.broadcast %cst_5 : f32 to vector<64x256xf32>
    %8 = arith.maximumf %6, %7 : vector<64x256xf32>
    %c0_6 = arith.constant 0 : index
    %c0_7 = arith.constant 0 : index
    %9 = vector.load %arg4[%c0_6, %c0_7] : memref<128x64xbf16, #tpu.memory_space<vmem>>, vector<128x64xbf16>
    %10 = arith.truncf %8 : vector<64x256xf32> to vector<64x256xbf16>
    %cst_8 = arith.constant dense<0.000000e+00> : vector<128x256xf32>
    %11 = tpu.matmul %9, %10, %cst_8 {dimension_numbers = #tpu.dot_dimension_numbers<[1], [0], [0], [1], [0, 0, 1, 1], [], []>} : vector<128x64xbf16>, vector<64x256xbf16>, vector<128x256xf32> -> vector<128x256xf32>
    %c0_9 = arith.constant 0 : index
    %c0_10 = arith.constant 0 : index
    %12 = vector.load %arg5[%c0_9, %c0_10] : memref<128x1xf32, #tpu.memory_space<vmem>>, vector<128x1xf32>
    %13 = vector.broadcast %12 : vector<128x1xf32> to vector<128x256xf32>
    %14 = arith.addf %11, %13 : vector<128x256xf32>
    %cst_11 = arith.constant 0.000000e+00 : f32
    %15 = vector.broadcast %cst_11 : f32 to vector<128x256xf32>
    %16 = arith.maximumf %14, %15 : vector<128x256xf32>
    %c0_12 = arith.constant 0 : index
    %c0_13 = arith.constant 0 : index
    %17 = vector.load %arg6[%c0_12, %c0_13] : memref<64x128xbf16, #tpu.memory_space<vmem>>, vector<64x128xbf16>
    %18 = arith.truncf %16 : vector<128x256xf32> to vector<128x256xbf16>
    %cst_14 = arith.constant dense<0.000000e+00> : vector<64x256xf32>
    %19 = tpu.matmul %17, %18, %cst_14 {dimension_numbers = #tpu.dot_dimension_numbers<[1], [0], [0], [1], [0, 0, 1, 1], [], []>} : vector<64x128xbf16>, vector<128x256xbf16>, vector<64x256xf32> -> vector<64x256xf32>
    %c0_15 = arith.constant 0 : index
    %c0_16 = arith.constant 0 : index
    %20 = vector.load %arg7[%c0_15, %c0_16] : memref<64x1xf32, #tpu.memory_space<vmem>>, vector<64x1xf32>
    %21 = vector.broadcast %20 : vector<64x1xf32> to vector<64x256xf32>
    %22 = arith.addf %19, %21 : vector<64x256xf32>
    %cst_17 = arith.constant 0.000000e+00 : f32
    %23 = vector.broadcast %cst_17 : f32 to vector<64x256xf32>
    %24 = arith.maximumf %22, %23 : vector<64x256xf32>
    %c0_18 = arith.constant 0 : index
    %c0_19 = arith.constant 0 : index
    %25 = vector.load %arg8[%c0_18, %c0_19] : memref<32x64xbf16, #tpu.memory_space<vmem>>, vector<32x64xbf16>
    %26 = arith.truncf %24 : vector<64x256xf32> to vector<64x256xbf16>
    %cst_20 = arith.constant dense<0.000000e+00> : vector<32x256xf32>
    %27 = tpu.matmul %25, %26, %cst_20 {dimension_numbers = #tpu.dot_dimension_numbers<[1], [0], [0], [1], [0, 0, 1, 1], [], []>} : vector<32x64xbf16>, vector<64x256xbf16>, vector<32x256xf32> -> vector<32x256xf32>
    %c0_21 = arith.constant 0 : index
    %c0_22 = arith.constant 0 : index
    %28 = vector.load %arg9[%c0_21, %c0_22] : memref<32x1xf32, #tpu.memory_space<vmem>>, vector<32x1xf32>
    %29 = vector.broadcast %28 : vector<32x1xf32> to vector<32x256xf32>
    %30 = arith.addf %27, %29 : vector<32x256xf32>
    %cst_23 = arith.constant 0.000000e+00 : f32
    %31 = vector.broadcast %cst_23 : f32 to vector<32x256xf32>
    %32 = arith.maximumf %30, %31 : vector<32x256xf32>
    %c0_24 = arith.constant 0 : index
    %c0_25 = arith.constant 0 : index
    %33 = vector.load %arg10[%c0_24, %c0_25] : memref<1x32xbf16, #tpu.memory_space<vmem>>, vector<1x32xbf16>
    %34 = arith.truncf %32 : vector<32x256xf32> to vector<32x256xbf16>
    %cst_26 = arith.constant dense<0.000000e+00> : vector<1x256xf32>
    %35 = tpu.matmul %33, %34, %cst_26 {dimension_numbers = #tpu.dot_dimension_numbers<[1], [0], [0], [1], [0, 0, 1, 1], [], []>} : vector<1x32xbf16>, vector<32x256xbf16>, vector<1x256xf32> -> vector<1x256xf32>
    %c0_27 = arith.constant 0 : index
    %c0_28 = arith.constant 0 : index
    %36 = vector.load %arg11[%c0_27, %c0_28] : memref<1x1xf32, #tpu.memory_space<vmem>>, vector<1x1xf32>
    %37 = vector.broadcast %36 : vector<1x1xf32> to vector<1x256xf32>
    %38 = arith.addf %35, %37 : vector<1x256xf32>
    %c0_29 = arith.constant 0 : index
    %c0_30 = arith.constant 0 : index
    %39 = vector.load %arg12[%c0_29, %c0_30] : memref<1x256xf32, #tpu.memory_space<vmem>>, vector<1x256xf32>
    tpu.vector_store %arg12[%c0_29, %c0_30], %38 {strides = array<i32>} : memref<1x256xf32, #tpu.memory_space<vmem>>, vector<1x256xf32>,
    return
  }
  func.func @transform_0(%arg0: i32) -> (i32, i32) {
    %c0_i32 = arith.constant 0 : i32
    %c0_i32_0 = arith.constant 0 : i32
    return %arg0, %c0_i32 : i32, i32
  }
  func.func @transform_1(%arg0: i32) -> (i32, i32) {
    %c0_i32 = arith.constant 0 : i32
    %c0_i32_0 = arith.constant 0 : i32
    %c0_i32_1 = arith.constant 0 : i32
    return %c0_i32, %c0_i32_0 : i32, i32
  }
  func.func @transform_2(%arg0: i32) -> (i32, i32) {
    %c0_i32 = arith.constant 0 : i32
    %c0_i32_0 = arith.constant 0 : i32
    %c0_i32_1 = arith.constant 0 : i32
    return %c0_i32, %c0_i32_0 : i32, i32
  }
  func.func @transform_3(%arg0: i32) -> (i32, i32) {
    %c0_i32 = arith.constant 0 : i32
    %c0_i32_0 = arith.constant 0 : i32
    %c0_i32_1 = arith.constant 0 : i32
    return %c0_i32, %c0_i32_0 : i32, i32
  }
  func.func @transform_4(%arg0: i32) -> (i32, i32) {
    %c0_i32 = arith.constant 0 : i32
    %c0_i32_0 = arith.constant 0 : i32
    %c0_i32_1 = arith.constant 0 : i32
    return %c0_i32, %c0_i32_0 : i32, i32
  }
  func.func @transform_5(%arg0: i32) -> (i32, i32) {
    %c0_i32 = arith.constant 0 : i32
    %c0_i32_0 = arith.constant 0 : i32
    %c0_i32_1 = arith.constant 0 : i32
    return %c0_i32, %c0_i32_0 : i32, i32
  }
  func.func @transform_6(%arg0: i32) -> (i32, i32) {
    %c0_i32 = arith.constant 0 : i32
    %c0_i32_0 = arith.constant 0 : i32
    %c0_i32_1 = arith.constant 0 : i32
    return %c0_i32, %c0_i32_0 : i32, i32
  }
  func.func @transform_7(%arg0: i32) -> (i32, i32) {
    %c0_i32 = arith.constant 0 : i32
    %c0_i32_0 = arith.constant 0 : i32
    %c0_i32_1 = arith.constant 0 : i32
    return %c0_i32, %c0_i32_0 : i32, i32
  }
  func.func @transform_8(%arg0: i32) -> (i32, i32) {
    %c0_i32 = arith.constant 0 : i32
    %c0_i32_0 = arith.constant 0 : i32
    %c0_i32_1 = arith.constant 0 : i32
    return %c0_i32, %c0_i32_0 : i32, i32
  }
  func.func @transform_9(%arg0: i32) -> (i32, i32) {
    %c0_i32 = arith.constant 0 : i32
    %c0_i32_0 = arith.constant 0 : i32
    %c0_i32_1 = arith.constant 0 : i32
    return %c0_i32, %c0_i32_0 : i32, i32
  }
  func.func @transform_10(%arg0: i32) -> (i32, i32) {
    %c0_i32 = arith.constant 0 : i32
    %c0_i32_0 = arith.constant 0 : i32
    %c0_i32_1 = arith.constant 0 : i32
    return %c0_i32, %c0_i32_0 : i32, i32
  }
  func.func @transform_11(%arg0: i32) -> (i32, i32) {
    %c0_i32 = arith.constant 0 : i32
    %c0_i32_0 = arith.constant 0 : i32
    return %c0_i32, %arg0 : i32, i32
  }
}

</mosaic_0001>

<llo_original>
// kernel: tpu_custom_call.1
$region0: #{tpu_custom_call.1}
  #allocation0 [shape = 'u32[]', space=smem, size = 0x4, offset = 0x4, fixed_abs, tag = 'smem constant byte address 0x4 - core index']
  #allocation1 [shape = 'u32[144,128]{1,0:T(1,128)}', space=vmem, size = 0x12000, scoped, tag = 'internal scratch']
  #allocation2 [shape = 'f32[1,1]{1,0:T(1,128)S(1)}', space=vmem, size = 0x200, scoped, tag = 'scoped memory for tpu_custom_call.1']
  %s0 = inlined_call_operand.vmem [shape: f32[256,16], index: 0, kind: input, shape index: {}]
  %s1 = inlined_call_operand.vmem [shape: bf16[64,16], index: 1, kind: input, shape index: {}]
  %s2 = inlined_call_operand.vmem [shape: f32[64,1], index: 2, kind: input, shape index: {}]
  %s3 = inlined_call_operand.vmem [shape: bf16[128,64], index: 3, kind: input, shape index: {}]
  %s4 = inlined_call_operand.vmem [shape: f32[128,1], index: 4, kind: input, shape index: {}]
  %s5 = inlined_call_operand.vmem [shape: bf16[64,128], index: 5, kind: input, shape index: {}]
  %s6 = inlined_call_operand.vmem [shape: f32[64,1], index: 6, kind: input, shape index: {}]
  %s7 = inlined_call_operand.vmem [shape: bf16[32,64], index: 7, kind: input, shape index: {}]
  %s8 = inlined_call_operand.vmem [shape: f32[32,1], index: 8, kind: input, shape index: {}]
  %s9 = inlined_call_operand.vmem [shape: bf16[1,32], index: 9, kind: input, shape index: {}]
  %s10 = inlined_call_operand.<no memory space> [shape: f32[1,1], index: 10, kind: input, shape index: {}]
  %s11 = inlined_call_operand.hbm [shape: f32[1,256], index: 11, kind: output, shape index: {}]
  %s12 = sld [smem:[#allocation0]]
  $region54: #{tpu_custom_call.1} parent=0
    _
  %s14 = ssub.s32 1, %s12
  %s15 = scalar_select 0, %s14, %s12
  %v16 = vstv %s10
  %17 = vst [vmem:[#allocation2] sm:$0x1] %v16
  $region1: #{tpu_custom_call.1} parent=0
    #allocation3 [shape = 'u8[1024]{0}', space=vmem, size = 0x400, scoped, tag = 'output window, operand 0, single buffered']
    #allocation4 [shape = 's32[1]{0}', space=sflag, size = 0x4, scoped, tag = 'scoped memory for tpu_custom_call.1']
    %18 = vsyncpa [#allocation4], 0
    // Predicated region
    $region2: #{tpu_custom_call.1} parent=1 // pred_check
      _
    $region3: #{tpu_custom_call.1} parent=1 // pred_check_branch
      %20 = sbr.rel (0) target = $region5
    $region4: #{tpu_custom_call.1} parent=1 // pred_region
      _
    $region5: #{tpu_custom_call.1} parent=1 // pred_fallthru
      _
    // Predicated region
    $region6: #{tpu_custom_call.1} parent=1 // pred_check
      _
    $region7: #{tpu_custom_call.1} parent=1 // pred_check_branch
      %22 = sbr.rel (0) target = $region9
    $region8: #{tpu_custom_call.1} parent=1 // pred_region
      _
    $region9: #{tpu_custom_call.1} parent=1 // pred_fallthru
      _
    // Predicated region
    $region10: #{tpu_custom_call.1} parent=1 // pred_check
      _
    $region11: #{tpu_custom_call.1} parent=1 // pred_check_branch
      %24 = sbr.rel (0) target = $region13
    $region12: #{tpu_custom_call.1} parent=1 // pred_region
      _
    $region13: #{tpu_custom_call.1} parent=1 // pred_fallthru
      _
    // Predicated region
    $region14: #{tpu_custom_call.1} parent=1 // pred_check
      _
    $region15: #{tpu_custom_call.1} parent=1 // pred_check_branch
      %26 = sbr.rel (0) target = $region17
    $region16: #{tpu_custom_call.1} parent=1 // pred_region
      _
    $region17: #{tpu_custom_call.1} parent=1 // pred_fallthru
      _
    // Predicated region
    $region18: #{tpu_custom_call.1} parent=1 // pred_check
      _
    $region19: #{tpu_custom_call.1} parent=1 // pred_check_branch
      %28 = sbr.rel (0) target = $region21
    $region20: #{tpu_custom_call.1} parent=1 // pred_region
      _
    $region21: #{tpu_custom_call.1} parent=1 // pred_fallthru
      _
    // Predicated region
    $region22: #{tpu_custom_call.1} parent=1 // pred_check
      _
    $region23: #{tpu_custom_call.1} parent=1 // pred_check_branch
      %30 = sbr.rel (0) target = $region25
    $region24: #{tpu_custom_call.1} parent=1 // pred_region
      _
    $region25: #{tpu_custom_call.1} parent=1 // pred_fallthru
      _
    // Predicated region
    $region26: #{tpu_custom_call.1} parent=1 // pred_check
      _
    $region27: #{tpu_custom_call.1} parent=1 // pred_check_branch
      %32 = sbr.rel (0) target = $region29
    $region28: #{tpu_custom_call.1} parent=1 // pred_region
      _
    $region29: #{tpu_custom_call.1} parent=1 // pred_fallthru
      _
    // Predicated region
    $region30: #{tpu_custom_call.1} parent=1 // pred_check
      _
    $region31: #{tpu_custom_call.1} parent=1 // pred_check_branch
      %34 = sbr.rel (0) target = $region33
    $region32: #{tpu_custom_call.1} parent=1 // pred_region
      _
    $region33: #{tpu_custom_call.1} parent=1 // pred_fallthru
      _
    // Predicated region
    $region34: #{tpu_custom_call.1} parent=1 // pred_check
      _
    $region35: #{tpu_custom_call.1} parent=1 // pred_check_branch
      %36 = sbr.rel (0) target = $region37
    $region36: #{tpu_custom_call.1} parent=1 // pred_region
      _
    $region37: #{tpu_custom_call.1} parent=1 // pred_fallthru
      _
    // Predicated region
    $region38: #{tpu_custom_call.1} parent=1 // pred_check
      _
    $region39: #{tpu_custom_call.1} parent=1 // pred_check_branch
      %38 = sbr.rel (0) target = $region41
    $region40: #{tpu_custom_call.1} parent=1 // pred_region
      _
    $region41: #{tpu_custom_call.1} parent=1 // pred_fallthru
      _
    // Predicated region
    $region42: #{tpu_custom_call.1} parent=1 // pred_check
      _
    $region43: #{tpu_custom_call.1} parent=1 // pred_check_branch
      %40 = sbr.rel (0) target = $region45
    $region44: #{tpu_custom_call.1} parent=1 // pred_region
      _
    $region45: #{tpu_custom_call.1} parent=1 // pred_fallthru
      _
    %v42 = vld [vmem:[%s0] sm:$0xff]
    %v43 = vld [vmem:[%s0 + $0x8] sm:$0xff]
    %v44 = vld [vmem:[%s0 + $0x10] sm:$0xff]
    %v45 = vld [vmem:[%s0 + $0x18] sm:$0xff]
    %v46 = vld [vmem:[%s0 + $0x20] sm:$0xff]
    %v47 = vld [vmem:[%s0 + $0x28] sm:$0xff]
    %v48 = vld [vmem:[%s0 + $0x30] sm:$0xff]
    %v49 = vld [vmem:[%s0 + $0x38] sm:$0xff]
    %v50 = vld [vmem:[%s0 + $0x40] sm:$0xff]
    %v51 = vld [vmem:[%s0 + $0x48] sm:$0xff]
    %v52 = vld [vmem:[%s0 + $0x50] sm:$0xff]
    %v53 = vld [vmem:[%s0 + $0x58] sm:$0xff]
    %v54 = vld [vmem:[%s0 + $0x60] sm:$0xff]
    %v55 = vld [vmem:[%s0 + $0x68] sm:$0xff]
    %v56 = vld [vmem:[%s0 + $0x70] sm:$0xff]
    %v57 = vld [vmem:[%s0 + $0x78] sm:$0xff]
    %v58 = vld [vmem:[%s0 + $0x80] sm:$0xff]
    %v59 = vld [vmem:[%s0 + $0x88] sm:$0xff]
    %v60 = vld [vmem:[%s0 + $0x90] sm:$0xff]
    %v61 = vld [vmem:[%s0 + $0x98] sm:$0xff]
    %v62 = vld [vmem:[%s0 + $0xa0] sm:$0xff]
    %v63 = vld [vmem:[%s0 + $0xa8] sm:$0xff]
    %v64 = vld [vmem:[%s0 + $0xb0] sm:$0xff]
    %v65 = vld [vmem:[%s0 + $0xb8] sm:$0xff]
    %v66 = vld [vmem:[%s0 + $0xc0] sm:$0xff]
    %v67 = vld [vmem:[%s0 + $0xc8] sm:$0xff]
    %v68 = vld [vmem:[%s0 + $0xd0] sm:$0xff]
    %v69 = vld [vmem:[%s0 + $0xd8] sm:$0xff]
    %v70 = vld [vmem:[%s0 + $0xe0] sm:$0xff]
    %v71 = vld [vmem:[%s0 + $0xe8] sm:$0xff]
    %v72 = vld [vmem:[%s0 + $0xf0] sm:$0xff]
    %v73 = vld [vmem:[%s0 + $0xf8] sm:$0xff]
    %v74 = vpack.c.bf16 %v43, %v42
    %v75 = vpack.c.bf16 %v45, %v44
    %v76 = vpack.c.bf16 %v47, %v46
    %v77 = vpack.c.bf16 %v49, %v48
    %v78 = vpack.c.bf16 %v51, %v50
    %v79 = vpack.c.bf16 %v53, %v52
    %v80 = vpack.c.bf16 %v55, %v54
    %v81 = vpack.c.bf16 %v57, %v56
    %v82 = vpack.c.bf16 %v59, %v58
    %v83 = vpack.c.bf16 %v61, %v60
    %v84 = vpack.c.bf16 %v63, %v62
    %v85 = vpack.c.bf16 %v65, %v64
    %v86 = vpack.c.bf16 %v67, %v66
    %v87 = vpack.c.bf16 %v69, %v68
    %v88 = vpack.c.bf16 %v71, %v70
    %v89 = vpack.c.bf16 %v73, %v72
    %v90 = vld [vmem:[%s1] sm:$0xf]
    %v91 = vld [vmem:[%s1 + $0x4] sm:$0xf]
    %v92 = vld [vmem:[%s1 + $0x8] sm:$0xf]
    %v93 = vld [vmem:[%s1 + $0xc] sm:$0xf]
    %v94 = vld [vmem:[%s1 + $0x10] sm:$0xf]
    %v95 = vld [vmem:[%s1 + $0x14] sm:$0xf]
    %v96 = vld [vmem:[%s1 + $0x18] sm:$0xf]
    %v97 = vld [vmem:[%s1 + $0x1c] sm:$0xf]
    %v98 = vld [vmem:[%s2] sm:$0xff]
    %v99 = vld [vmem:[%s2 + $0x8] sm:$0xff]
    %v100 = vld [vmem:[%s2 + $0x10] sm:$0xff]
    %v101 = vld [vmem:[%s2 + $0x18] sm:$0xff]
    %v102 = vld [vmem:[%s2 + $0x20] sm:$0xff]
    %v103 = vld [vmem:[%s2 + $0x28] sm:$0xff]
    %v104 = vld [vmem:[%s2 + $0x30] sm:$0xff]
    %v105 = vld [vmem:[%s2 + $0x38] sm:$0xff]
    %107 = vset.pattern.permute.xlu0 0
    %108 = vperm.xlu0 %107, %v98
    %v109 = vpop.permute.xlu0 %108
    %112 = vset.pattern.permute.xlu0 0
    %113 = vperm.xlu0 %112, %v99
    %v114 = vpop.permute.xlu0 %113
    %117 = vset.pattern.permute.xlu0 0
    %118 = vperm.xlu0 %117, %v100
    %v119 = vpop.permute.xlu0 %118
    %122 = vset.pattern.permute.xlu0 0
    %123 = vperm.xlu0 %122, %v101
    %v124 = vpop.permute.xlu0 %123
    %127 = vset.pattern.permute.xlu0 0
    %128 = vperm.xlu0 %127, %v102
    %v129 = vpop.permute.xlu0 %128
    %132 = vset.pattern.permute.xlu0 0
    %133 = vperm.xlu0 %132, %v103
    %v134 = vpop.permute.xlu0 %133
    %137 = vset.pattern.permute.xlu0 0
    %138 = vperm.xlu0 %137, %v104
    %v139 = vpop.permute.xlu0 %138
    %142 = vset.pattern.permute.xlu0 0
    %143 = vperm.xlu0 %142, %v105
    %v144 = vpop.permute.xlu0 %143
    %v154 = vunpack.c.l.b16 %v90
    %v155 = vunpack.c.l.b16 %v91
    %v156 = vunpack.c.l.b16 %v92
    %v157 = vunpack.c.l.b16 %v93
    %v158 = vunpack.c.l.b16 %v94
    %v159 = vunpack.c.l.b16 %v95
    %v160 = vunpack.c.l.b16 %v96
    %v161 = vunpack.c.l.b16 %v97
    %v162 = vpack.c.b16 %v155, %v154
    %v163 = vpack.c.b16 %v157, %v156
    %v164 = vpack.c.b16 %v159, %v158
    %v165 = vpack.c.b16 %v161, %v160
    %vm166 = vcmask 130048
    %v168 = vsel %vm166, %v162, 0
    %v171 = vsel %vm166, %v163, 0
    %v174 = vsel %vm166, %v164, 0
    %v177 = vsel %vm166, %v165, 0
    %v180 = vsel %vm166, %v74, 0
    %v183 = vsel %vm166, %v75, 0
    %v186 = vsel %vm166, %v76, 0
    %v189 = vsel %vm166, %v77, 0
    %v192 = vsel %vm166, %v78, 0
    %v195 = vsel %vm166, %v79, 0
    %v198 = vsel %vm166, %v80, 0
    %v201 = vsel %vm166, %v81, 0
    %v204 = vsel %vm166, %v82, 0
    %v207 = vsel %vm166, %v83, 0
    %v210 = vsel %vm166, %v84, 0
    %v213 = vsel %vm166, %v85, 0
    %v216 = vsel %vm166, %v86, 0
    %v219 = vsel %vm166, %v87, 0
    %v222 = vsel %vm166, %v88, 0
    %v225 = vsel %vm166, %v89, 0
    %227 = vmatprep.subr.bf16.mxu0 0
    %228 = vmatpush1.bf16.xpose.msra.mxu0 %v180
    %229 = vmatprep.subr.bf16.mxu0 0
    %230 = vmatpush1.bf16.xpose.msra.mxu0 %v183
    %231 = vmatprep.subr.bf16.mxu0 0
    %232 = vmatpush1.bf16.xpose.msra.mxu0 %v186
    %233 = vmatprep.subr.bf16.mxu0 0
    %234 = vmatpush1.bf16.xpose.msra.mxu0 %v189
    %235 = vmatprep.subr.bf16.mxu0 0
    %236 = vmatpush1.bf16.xpose.msra.mxu0 %v192
    %237 = vmatprep.subr.bf16.mxu0 0
    %238 = vmatpush1.bf16.xpose.msra.mxu0 %v195
    %239 = vmatprep.subr.bf16.mxu0 0
    %240 = vmatpush1.bf16.xpose.msra.mxu0 %v198
    %241 = vmatprep.subr.bf16.mxu0 0
    %242 = vmatpush1.bf16.xpose.msra.mxu0 %v201
    %243 = vmatprep.subr.bf16.mxu0 0
    %244 = vmatpush1.bf16.xpose.msra.mxu0 %v204
    %245 = vmatprep.subr.bf16.mxu0 0
    %246 = vmatpush1.bf16.xpose.msra.mxu0 %v207
    %247 = vmatprep.subr.bf16.mxu0 0
    %248 = vmatpush1.bf16.xpose.msra.mxu0 %v210
    %249 = vmatprep.subr.bf16.mxu0 0
    %250 = vmatpush1.bf16.xpose.msra.mxu0 %v213
    %251 = vmatprep.subr.bf16.mxu0 0
    %252 = vmatpush1.bf16.xpose.msra.mxu0 %v216
    %253 = vmatprep.subr.bf16.mxu0 0
    %254 = vmatpush1.bf16.xpose.msra.mxu0 %v219
    %255 = vmatprep.subr.bf16.mxu0 0
    %256 = vmatpush1.bf16.xpose.msra.mxu0 %v222
    %257 = vmatprep.subr.bf16.mxu0 0
    %258 = vmatpush1.bf16.xpose.msra.mxu0 %v225
    %259 = vmatprep.mubr.bf16.mxu0 0
    %260 = vmatmul.mubr.bf16.gmra.mrb[0].mxu0 %v168
    %v261 = vpop.f32.mrb[0].mxu0
    %v262 = vadd.f32 %v109, %v261
    %v263 = vpop.f32.mrb[0].mxu0
    %v264 = vadd.f32 %v109, %v263
    %v265 = vpop.f32.mrb[0].mxu0
    %v266 = vadd.f32 %v114, %v265
    %v267 = vpop.f32.mrb[0].mxu0
    %v268 = vadd.f32 %v114, %v267
    %269 = vmatprep.mubr.bf16.mxu0 0
    %270 = vmatmul.mubr.bf16.gmra.mrb[0].mxu0 %v171
    %v271 = vpop.f32.mrb[0].mxu0
    %v272 = vadd.f32 %v119, %v271
    %v273 = vpop.f32.mrb[0].mxu0
    %v274 = vadd.f32 %v119, %v273
    %v275 = vpop.f32.mrb[0].mxu0
    %v276 = vadd.f32 %v124, %v275
    %v277 = vpop.f32.mrb[0].mxu0
    %v278 = vadd.f32 %v124, %v277
    %279 = vmatprep.mubr.bf16.mxu0 0
    %280 = vmatmul.mubr.bf16.gmra.mrb[0].mxu0 %v174
    %v281 = vpop.f32.mrb[0].mxu0
    %v282 = vadd.f32 %v129, %v281
    %v283 = vpop.f32.mrb[0].mxu0
    %v284 = vadd.f32 %v129, %v283
    %v285 = vpop.f32.mrb[0].mxu0
    %v286 = vadd.f32 %v134, %v285
    %v287 = vpop.f32.mrb[0].mxu0
    %v288 = vadd.f32 %v134, %v287
    %289 = vmatprep.mubr.bf16.mxu0 0
    %290 = vmatmul.mubr.bf16.gmra.mrb[0].mxu0 %v177
    %v291 = vpop.f32.mrb[0].mxu0
    %v292 = vadd.f32 %v139, %v291
    %v293 = vpop.f32.mrb[0].mxu0
    %v294 = vadd.f32 %v139, %v293
    %v295 = vpop.f32.mrb[0].mxu0
    %v296 = vadd.f32 %v144, %v295
    %v297 = vpop.f32.mrb[0].mxu0
    %v298 = vadd.f32 %v144, %v297
    %299 = vdwg.mxu0
    %v300 = vmax.f32 %v262, 0.0
    %v301 = vmax.f32 %v264, 0.0
    %v302 = vmax.f32 %v266, 0.0
    %v303 = vmax.f32 %v268, 0.0
    %v304 = vmax.f32 %v272, 0.0
    %v305 = vmax.f32 %v274, 0.0
    %v306 = vmax.f32 %v276, 0.0
    %v307 = vmax.f32 %v278, 0.0
    %v308 = vmax.f32 %v282, 0.0
    %v309 = vmax.f32 %v284, 0.0
    %v310 = vmax.f32 %v286, 0.0
    %v311 = vmax.f32 %v288, 0.0
    %v312 = vmax.f32 %v292, 0.0
    %v313 = vmax.f32 %v294, 0.0
    %v314 = vmax.f32 %v296, 0.0
    %v315 = vmax.f32 %v298, 0.0
    %v316 = vld [vmem:[%s3] sm:$0xf]
    %v317 = vld [vmem:[%s3 + $0x4] sm:$0xf]
    %v318 = vld [vmem:[%s3 + $0x8] sm:$0xf]
    %v319 = vld [vmem:[%s3 + $0xc] sm:$0xf]
    %v320 = vld [vmem:[%s3 + $0x10] sm:$0xf]
    %v321 = vld [vmem:[%s3 + $0x14] sm:$0xf]
    %v322 = vld [vmem:[%s3 + $0x18] sm:$0xf]
    %v323 = vld [vmem:[%s3 + $0x1c] sm:$0xf]
    %v324 = vld [vmem:[%s3 + $0x20] sm:$0xf]
    %v325 = vld [vmem:[%s3 + $0x24] sm:$0xf]
    %v326 = vld [vmem:[%s3 + $0x28] sm:$0xf]
    %v327 = vld [vmem:[%s3 + $0x2c] sm:$0xf]
    %v328 = vld [vmem:[%s3 + $0x30] sm:$0xf]
    %v329 = vld [vmem:[%s3 + $0x34] sm:$0xf]
    %v330 = vld [vmem:[%s3 + $0x38] sm:$0xf]
    %v331 = vld [vmem:[%s3 + $0x3c] sm:$0xf]
    %v332 = vpack.c.bf16 %v302, %v300
    %v333 = vpack.c.bf16 %v303, %v301
    %v334 = vpack.c.bf16 %v306, %v304
    %v335 = vpack.c.bf16 %v307, %v305
    %v336 = vpack.c.bf16 %v310, %v308
    %v337 = vpack.c.bf16 %v311, %v309
    %v338 = vpack.c.bf16 %v314, %v312
    %v339 = vpack.c.bf16 %v315, %v313
    %v340 = vld [vmem:[%s4] sm:$0xff]
    %v341 = vld [vmem:[%s4 + $0x8] sm:$0xff]
    %v342 = vld [vmem:[%s4 + $0x10] sm:$0xff]
    %v343 = vld [vmem:[%s4 + $0x18] sm:$0xff]
    %v344 = vld [vmem:[%s4 + $0x20] sm:$0xff]
    %v345 = vld [vmem:[%s4 + $0x28] sm:$0xff]
    %v346 = vld [vmem:[%s4 + $0x30] sm:$0xff]
    %v347 = vld [vmem:[%s4 + $0x38] sm:$0xff]
    %v348 = vld [vmem:[%s4 + $0x40] sm:$0xff]
    %v349 = vld [vmem:[%s4 + $0x48] sm:$0xff]
    %v350 = vld [vmem:[%s4 + $0x50] sm:$0xff]
    %v351 = vld [vmem:[%s4 + $0x58] sm:$0xff]
    %v352 = vld [vmem:[%s4 + $0x60] sm:$0xff]
    %v353 = vld [vmem:[%s4 + $0x68] sm:$0xff]
    %v354 = vld [vmem:[%s4 + $0x70] sm:$0xff]
    %v355 = vld [vmem:[%s4 + $0x78] sm:$0xff]
    %357 = vset.pattern.permute.xlu0 0
    %358 = vperm.xlu0 %357, %v340
    %v359 = vpop.permute.xlu0 %358
    %362 = vset.pattern.permute.xlu0 0
    %363 = vperm.xlu0 %362, %v341
    %v364 = vpop.permute.xlu0 %363
    %367 = vset.pattern.permute.xlu0 0
    %368 = vperm.xlu0 %367, %v342
    %v369 = vpop.permute.xlu0 %368
    %372 = vset.pattern.permute.xlu0 0
    %373 = vperm.xlu0 %372, %v343
    %v374 = vpop.permute.xlu0 %373
    %377 = vset.pattern.permute.xlu0 0
    %378 = vperm.xlu0 %377, %v344
    %v379 = vpop.permute.xlu0 %378
    %382 = vset.pattern.permute.xlu0 0
    %383 = vperm.xlu0 %382, %v345
    %v384 = vpop.permute.xlu0 %383
    %387 = vset.pattern.permute.xlu0 0
    %388 = vperm.xlu0 %387, %v346
    %v389 = vpop.permute.xlu0 %388
    %392 = vset.pattern.permute.xlu0 0
    %393 = vperm.xlu0 %392, %v347
    %v394 = vpop.permute.xlu0 %393
    %397 = vset.pattern.permute.xlu0 0
    %398 = vperm.xlu0 %397, %v348
    %v399 = vpop.permute.xlu0 %398
    %402 = vset.pattern.permute.xlu0 0
    %403 = vperm.xlu0 %402, %v349
    %v404 = vpop.permute.xlu0 %403
    %407 = vset.pattern.permute.xlu0 0
    %408 = vperm.xlu0 %407, %v350
    %v409 = vpop.permute.xlu0 %408
    %412 = vset.pattern.permute.xlu0 0
    %413 = vperm.xlu0 %412, %v351
    %v414 = vpop.permute.xlu0 %413
    %417 = vset.pattern.permute.xlu0 0
    %418 = vperm.xlu0 %417, %v352
    %v419 = vpop.permute.xlu0 %418
    %422 = vset.pattern.permute.xlu0 0
    %423 = vperm.xlu0 %422, %v353
    %v424 = vpop.permute.xlu0 %423
    %427 = vset.pattern.permute.xlu0 0
    %428 = vperm.xlu0 %427, %v354
    %v429 = vpop.permute.xlu0 %428
    %432 = vset.pattern.permute.xlu0 0
    %433 = vperm.xlu0 %432, %v355
    %v434 = vpop.permute.xlu0 %433
    %v452 = vunpack.c.l.b16 %v316
    %v453 = vunpack.c.l.b16 %v317
    %v454 = vunpack.c.l.b16 %v318
    %v455 = vunpack.c.l.b16 %v319
    %v456 = vunpack.c.l.b16 %v320
    %v457 = vunpack.c.l.b16 %v321
    %v458 = vunpack.c.l.b16 %v322
    %v459 = vunpack.c.l.b16 %v323
    %v460 = vunpack.c.l.b16 %v324
    %v461 = vunpack.c.l.b16 %v325
    %v462 = vunpack.c.l.b16 %v326
    %v463 = vunpack.c.l.b16 %v327
    %v464 = vunpack.c.l.b16 %v328
    %v465 = vunpack.c.l.b16 %v329
    %v466 = vunpack.c.l.b16 %v330
    %v467 = vunpack.c.l.b16 %v331
    %v468 = vpack.c.b16 %v453, %v452
    %v469 = vpack.c.b16 %v455, %v454
    %v470 = vpack.c.b16 %v457, %v456
    %v471 = vpack.c.b16 %v459, %v458
    %v472 = vpack.c.b16 %v461, %v460
    %v473 = vpack.c.b16 %v463, %v462
    %v474 = vpack.c.b16 %v465, %v464
    %v475 = vpack.c.b16 %v467, %v466
    %vm476 = vcmask 523264
    %v478 = vsel %vm476, %v468, 0
    %v481 = vsel %vm476, %v469, 0
    %v484 = vsel %vm476, %v470, 0
    %v487 = vsel %vm476, %v471, 0
    %v490 = vsel %vm476, %v472, 0
    %v493 = vsel %vm476, %v473, 0
    %v496 = vsel %vm476, %v474, 0
    %v499 = vsel %vm476, %v475, 0
    %501 = vmatprep.subr.bf16.mxu0 %v333
    %502 = vmatpush1.bf16.msra.mxu0 %v332
    %503 = vmatprep.subr.bf16.mxu0 %v335
    %504 = vmatpush1.bf16.msra.mxu0 %v334
    %505 = vmatprep.subr.bf16.mxu0 %v337
    %506 = vmatpush1.bf16.msra.mxu0 %v336
    %507 = vmatprep.subr.bf16.mxu0 %v339
    %508 = vmatpush1.bf16.msra.mxu0 %v338
    %509 = vmatprep.subr.bf16.mxu0 0
    %510 = vmatpush1.bf16.msra.mxu0 0
    %511 = vmatprep.subr.bf16.mxu0 0
    %512 = vmatpush1.bf16.msra.mxu0 0
    %513 = vmatprep.subr.bf16.mxu0 0
    %514 = vmatpush1.bf16.msra.mxu0 0
    %515 = vmatprep.subr.bf16.mxu0 0
    %516 = vmatpush1.bf16.msra.mxu0 0
    %517 = vmatprep.subr.bf16.mxu0 0
    %518 = vmatpush1.bf16.msra.mxu0 0
    %519 = vmatprep.subr.bf16.mxu0 0
    %520 = vmatpush1.bf16.msra.mxu0 0
    %521 = vmatprep.subr.bf16.mxu0 0
    %522 = vmatpush1.bf16.msra.mxu0 0
    %523 = vmatprep.subr.bf16.mxu0 0
    %524 = vmatpush1.bf16.msra.mxu0 0
    %525 = vmatprep.subr.bf16.mxu0 0
    %526 = vmatpush1.bf16.msra.mxu0 0
    %527 = vmatprep.subr.bf16.mxu0 0
    %528 = vmatpush1.bf16.msra.mxu0 0
    %529 = vmatprep.subr.bf16.mxu0 0
    %530 = vmatpush1.bf16.msra.mxu0 0
    %531 = vmatprep.subr.bf16.mxu0 0
    %532 = vmatpush1.bf16.msra.mxu0 0
    %533 = vmatprep.mubr.bf16.mxu0 0
    %534 = vmatmul.mubr.bf16.gmra.mrb[0].mxu0 %v478
    %v535 = vpop.f32.mrb[0].mxu0
    %v536 = vadd.f32 %v359, %v535
    %v537 = vpop.f32.mrb[0].mxu0
    %v538 = vadd.f32 %v359, %v537
    %v539 = vpop.f32.mrb[0].mxu0
    %v540 = vadd.f32 %v364, %v539
    %v541 = vpop.f32.mrb[0].mxu0
    %v542 = vadd.f32 %v364, %v541
    %543 = vmatprep.mubr.bf16.mxu0 0
    %544 = vmatmul.mubr.bf16.gmra.mrb[0].mxu0 %v481
    %v545 = vpop.f32.mrb[0].mxu0
    %v546 = vadd.f32 %v369, %v545
    %v547 = vpop.f32.mrb[0].mxu0
    %v548 = vadd.f32 %v369, %v547
    %v549 = vpop.f32.mrb[0].mxu0
    %v550 = vadd.f32 %v374, %v549
    %v551 = vpop.f32.mrb[0].mxu0
    %v552 = vadd.f32 %v374, %v551
    %553 = vmatprep.mubr.bf16.mxu0 0
    %554 = vmatmul.mubr.bf16.gmra.mrb[0].mxu0 %v484
    %v555 = vpop.f32.mrb[0].mxu0
    %v556 = vadd.f32 %v379, %v555
    %v557 = vpop.f32.mrb[0].mxu0
    %v558 = vadd.f32 %v379, %v557
    %v559 = vpop.f32.mrb[0].mxu0
    %v560 = vadd.f32 %v384, %v559
    %v561 = vpop.f32.mrb[0].mxu0
    %v562 = vadd.f32 %v384, %v561
    %563 = vmatprep.mubr.bf16.mxu0 0
    %564 = vmatmul.mubr.bf16.gmra.mrb[0].mxu0 %v487
    %v565 = vpop.f32.mrb[0].mxu0
    %v566 = vadd.f32 %v389, %v565
    %v567 = vpop.f32.mrb[0].mxu0
    %v568 = vadd.f32 %v389, %v567
    %v569 = vpop.f32.mrb[0].mxu0
    %v570 = vadd.f32 %v394, %v569
    %v571 = vpop.f32.mrb[0].mxu0
    %v572 = vadd.f32 %v394, %v571
    %573 = vmatprep.mubr.bf16.mxu0 0
    %574 = vmatmul.mubr.bf16.gmra.mrb[0].mxu0 %v490
    %v575 = vpop.f32.mrb[0].mxu0
    %v576 = vadd.f32 %v399, %v575
    %v577 = vpop.f32.mrb[0].mxu0
    %v578 = vadd.f32 %v399, %v577
    %v579 = vpop.f32.mrb[0].mxu0
    %v580 = vadd.f32 %v404, %v579
    %v581 = vpop.f32.mrb[0].mxu0
    %v582 = vadd.f32 %v404, %v581
    %583 = vmatprep.mubr.bf16.mxu0 0
    %584 = vmatmul.mubr.bf16.gmra.mrb[0].mxu0 %v493
    %v585 = vpop.f32.mrb[0].mxu0
    %v586 = vadd.f32 %v409, %v585
    %v587 = vpop.f32.mrb[0].mxu0
    %v588 = vadd.f32 %v409, %v587
    %v589 = vpop.f32.mrb[0].mxu0
    %v590 = vadd.f32 %v414, %v589
    %v591 = vpop.f32.mrb[0].mxu0
    %v592 = vadd.f32 %v414, %v591
    %593 = vmatprep.mubr.bf16.mxu0 0
    %594 = vmatmul.mubr.bf16.gmra.mrb[0].mxu0 %v496
    %v595 = vpop.f32.mrb[0].mxu0
    %v596 = vadd.f32 %v419, %v595
    %v597 = vpop.f32.mrb[0].mxu0
    %v598 = vadd.f32 %v419, %v597
    %v599 = vpop.f32.mrb[0].mxu0
    %v600 = vadd.f32 %v424, %v599
    %v601 = vpop.f32.mrb[0].mxu0
    %v602 = vadd.f32 %v424, %v601
    %603 = vmatprep.mubr.bf16.mxu0 0
    %604 = vmatmul.mubr.bf16.gmra.mrb[0].mxu0 %v499
    %v605 = vpop.f32.mrb[0].mxu0
    %v606 = vadd.f32 %v429, %v605
    %v607 = vpop.f32.mrb[0].mxu0
    %v608 = vadd.f32 %v429, %v607
    %v609 = vpop.f32.mrb[0].mxu0
    %v610 = vadd.f32 %v434, %v609
    %v611 = vpop.f32.mrb[0].mxu0
    %v612 = vadd.f32 %v434, %v611
    %613 = vdwg.mxu0
    %v614 = vmax.f32 %v536, 0.0
    %v615 = vmax.f32 %v538, 0.0
    %v616 = vmax.f32 %v540, 0.0
    %v617 = vmax.f32 %v542, 0.0
    %v618 = vmax.f32 %v546, 0.0
    %v619 = vmax.f32 %v548, 0.0
    %v620 = vmax.f32 %v550, 0.0
    %v621 = vmax.f32 %v552, 0.0
    %v622 = vmax.f32 %v556, 0.0
    %v623 = vmax.f32 %v558, 0.0
    %v624 = vmax.f32 %v560, 0.0
    %v625 = vmax.f32 %v562, 0.0
    %v626 = vmax.f32 %v566, 0.0
    %v627 = vmax.f32 %v568, 0.0
    %v628 = vmax.f32 %v570, 0.0
    %v629 = vmax.f32 %v572, 0.0
    %v630 = vmax.f32 %v576, 0.0
    %v631 = vmax.f32 %v578, 0.0
    %v632 = vmax.f32 %v580, 0.0
    %v633 = vmax.f32 %v582, 0.0
    %v634 = vmax.f32 %v586, 0.0
    %v635 = vmax.f32 %v588, 0.0
    %v636 = vmax.f32 %v590, 0.0
    %v637 = vmax.f32 %v592, 0.0
    %v638 = vmax.f32 %v596, 0.0
    %v639 = vmax.f32 %v598, 0.0
    %v640 = vmax.f32 %v600, 0.0
    %v641 = vmax.f32 %v602, 0.0
    %v642 = vmax.f32 %v606, 0.0
    %v643 = vmax.f32 %v608, 0.0
    %v644 = vmax.f32 %v610, 0.0
    %v645 = vmax.f32 %v612, 0.0
    %v646 = vld [vmem:[%s5] sm:$0xf]
    %v647 = vld [vmem:[%s5 + $0x4] sm:$0xf]
    %v648 = vld [vmem:[%s5 + $0x8] sm:$0xf]
    %v649 = vld [vmem:[%s5 + $0xc] sm:$0xf]
    %v650 = vld [vmem:[%s5 + $0x10] sm:$0xf]
    %v651 = vld [vmem:[%s5 + $0x14] sm:$0xf]
    %v652 = vld [vmem:[%s5 + $0x18] sm:$0xf]
    %v653 = vld [vmem:[%s5 + $0x1c] sm:$0xf]
    %v654 = vpack.c.bf16 %v616, %v614
    %v655 = vpack.c.bf16 %v617, %v615
    %v656 = vpack.c.bf16 %v620, %v618
    %v657 = vpack.c.bf16 %v621, %v619
    %v658 = vpack.c.bf16 %v624, %v622
    %v659 = vpack.c.bf16 %v625, %v623
    %v660 = vpack.c.bf16 %v628, %v626
    %v661 = vpack.c.bf16 %v629, %v627
    %v662 = vpack.c.bf16 %v632, %v630
    %v663 = vpack.c.bf16 %v633, %v631
    %v664 = vpack.c.bf16 %v636, %v634
    %v665 = vpack.c.bf16 %v637, %v635
    %v666 = vpack.c.bf16 %v640, %v638
    %v667 = vpack.c.bf16 %v641, %v639
    %v668 = vpack.c.bf16 %v644, %v642
    %v669 = vpack.c.bf16 %v645, %v643
    %v670 = vld [vmem:[%s6] sm:$0xff]
    %v671 = vld [vmem:[%s6 + $0x8] sm:$0xff]
    %v672 = vld [vmem:[%s6 + $0x10] sm:$0xff]
    %v673 = vld [vmem:[%s6 + $0x18] sm:$0xff]
    %v674 = vld [vmem:[%s6 + $0x20] sm:$0xff]
    %v675 = vld [vmem:[%s6 + $0x28] sm:$0xff]
    %v676 = vld [vmem:[%s6 + $0x30] sm:$0xff]
    %v677 = vld [vmem:[%s6 + $0x38] sm:$0xff]
    %679 = vset.pattern.permute.xlu0 0
    %680 = vperm.xlu0 %679, %v670
    %v681 = vpop.permute.xlu0 %680
    %684 = vset.pattern.permute.xlu0 0
    %685 = vperm.xlu0 %684, %v671
    %v686 = vpop.permute.xlu0 %685
    %689 = vset.pattern.permute.xlu0 0
    %690 = vperm.xlu0 %689, %v672
    %v691 = vpop.permute.xlu0 %690
    %694 = vset.pattern.permute.xlu0 0
    %695 = vperm.xlu0 %694, %v673
    %v696 = vpop.permute.xlu0 %695
    %699 = vset.pattern.permute.xlu0 0
    %700 = vperm.xlu0 %699, %v674
    %v701 = vpop.permute.xlu0 %700
    %704 = vset.pattern.permute.xlu0 0
    %705 = vperm.xlu0 %704, %v675
    %v706 = vpop.permute.xlu0 %705
    %709 = vset.pattern.permute.xlu0 0
    %710 = vperm.xlu0 %709, %v676
    %v711 = vpop.permute.xlu0 %710
    %714 = vset.pattern.permute.xlu0 0
    %715 = vperm.xlu0 %714, %v677
    %v716 = vpop.permute.xlu0 %715
    %v726 = vunpack.c.l.b16 %v646
    %v727 = vunpack.c.l.b16 %v647
    %v728 = vunpack.c.l.b16 %v648
    %v729 = vunpack.c.l.b16 %v649
    %v730 = vunpack.c.l.b16 %v650
    %v731 = vunpack.c.l.b16 %v651
    %v732 = vunpack.c.l.b16 %v652
    %v733 = vunpack.c.l.b16 %v653
    %v734 = vpack.c.b16 %v727, %v726
    %v735 = vpack.c.b16 %v729, %v728
    %v736 = vpack.c.b16 %v731, %v730
    %v737 = vpack.c.b16 %v733, %v732
    %742 = vmatprep.subr.bf16.mxu0 %v655
    %743 = vmatpush1.bf16.msra.mxu0 %v654
    %744 = vmatprep.subr.bf16.mxu0 %v657
    %745 = vmatpush1.bf16.msra.mxu0 %v656
    %746 = vmatprep.subr.bf16.mxu0 %v659
    %747 = vmatpush1.bf16.msra.mxu0 %v658
    %748 = vmatprep.subr.bf16.mxu0 %v661
    %749 = vmatpush1.bf16.msra.mxu0 %v660
    %750 = vmatprep.subr.bf16.mxu0 %v663
    %751 = vmatpush1.bf16.msra.mxu0 %v662
    %752 = vmatprep.subr.bf16.mxu0 %v665
    %753 = vmatpush1.bf16.msra.mxu0 %v664
    %754 = vmatprep.subr.bf16.mxu0 %v667
    %755 = vmatpush1.bf16.msra.mxu0 %v666
    %756 = vmatprep.subr.bf16.mxu0 %v669
    %757 = vmatpush1.bf16.msra.mxu0 %v668
    %758 = vmatprep.subr.bf16.mxu0 0
    %759 = vmatpush1.bf16.msra.mxu0 0
    %760 = vmatprep.subr.bf16.mxu0 0
    %761 = vmatpush1.bf16.msra.mxu0 0
    %762 = vmatprep.subr.bf16.mxu0 0
    %763 = vmatpush1.bf16.msra.mxu0 0
    %764 = vmatprep.subr.bf16.mxu0 0
    %765 = vmatpush1.bf16.msra.mxu0 0
    %766 = vmatprep.subr.bf16.mxu0 0
    %767 = vmatpush1.bf16.msra.mxu0 0
    %768 = vmatprep.subr.bf16.mxu0 0
    %769 = vmatpush1.bf16.msra.mxu0 0
    %770 = vmatprep.subr.bf16.mxu0 0
    %771 = vmatpush1.bf16.msra.mxu0 0
    %772 = vmatprep.subr.bf16.mxu0 0
    %773 = vmatpush1.bf16.msra.mxu0 0
    %774 = vmatprep.mubr.bf16.mxu0 0
    %775 = vmatmul.mubr.bf16.gmra.mrb[0].mxu0 %v734
    %v776 = vpop.f32.mrb[0].mxu0
    %v777 = vadd.f32 %v681, %v776
    %v778 = vpop.f32.mrb[0].mxu0
    %v779 = vadd.f32 %v681, %v778
    %v780 = vpop.f32.mrb[0].mxu0
    %v781 = vadd.f32 %v686, %v780
    %v782 = vpop.f32.mrb[0].mxu0
    %v783 = vadd.f32 %v686, %v782
    %784 = vmatprep.mubr.bf16.mxu0 0
    %785 = vmatmul.mubr.bf16.gmra.mrb[0].mxu0 %v735
    %v786 = vpop.f32.mrb[0].mxu0
    %v787 = vadd.f32 %v691, %v786
    %v788 = vpop.f32.mrb[0].mxu0
    %v789 = vadd.f32 %v691, %v788
    %v790 = vpop.f32.mrb[0].mxu0
    %v791 = vadd.f32 %v696, %v790
    %v792 = vpop.f32.mrb[0].mxu0
    %v793 = vadd.f32 %v696, %v792
    %794 = vmatprep.mubr.bf16.mxu0 0
    %795 = vmatmul.mubr.bf16.gmra.mrb[0].mxu0 %v736
    %v796 = vpop.f32.mrb[0].mxu0
    %v797 = vadd.f32 %v701, %v796
    %v798 = vpop.f32.mrb[0].mxu0
    %v799 = vadd.f32 %v701, %v798
    %v800 = vpop.f32.mrb[0].mxu0
    %v801 = vadd.f32 %v706, %v800
    %v802 = vpop.f32.mrb[0].mxu0
    %v803 = vadd.f32 %v706, %v802
    %804 = vmatprep.mubr.bf16.mxu0 0
    %805 = vmatmul.mubr.bf16.gmra.mrb[0].mxu0 %v737
    %v806 = vpop.f32.mrb[0].mxu0
    %v807 = vadd.f32 %v711, %v806
    %v808 = vpop.f32.mrb[0].mxu0
    %v809 = vadd.f32 %v711, %v808
    %v810 = vpop.f32.mrb[0].mxu0
    %v811 = vadd.f32 %v716, %v810
    %v812 = vpop.f32.mrb[0].mxu0
    %v813 = vadd.f32 %v716, %v812
    %814 = vdwg.mxu0
    %v815 = vmax.f32 %v777, 0.0
    %v816 = vmax.f32 %v779, 0.0
    %v817 = vmax.f32 %v781, 0.0
    %v818 = vmax.f32 %v783, 0.0
    %v819 = vmax.f32 %v787, 0.0
    %v820 = vmax.f32 %v789, 0.0
    %v821 = vmax.f32 %v791, 0.0
    %v822 = vmax.f32 %v793, 0.0
    %v823 = vmax.f32 %v797, 0.0
    %v824 = vmax.f32 %v799, 0.0
    %v825 = vmax.f32 %v801, 0.0
    %v826 = vmax.f32 %v803, 0.0
    %v827 = vmax.f32 %v807, 0.0
    %v828 = vmax.f32 %v809, 0.0
    %v829 = vmax.f32 %v811, 0.0
    %v830 = vmax.f32 %v813, 0.0
    %v831 = vld [vmem:[%s7] sm:$0xf]
    %v832 = vld [vmem:[%s7 + $0x4] sm:$0xf]
    %v833 = vld [vmem:[%s7 + $0x8] sm:$0xf]
    %v834 = vld [vmem:[%s7 + $0xc] sm:$0xf]
    %v835 = vpack.c.bf16 %v817, %v815
    %v836 = vpack.c.bf16 %v818, %v816
    %v837 = vpack.c.bf16 %v821, %v819
    %v838 = vpack.c.bf16 %v822, %v820
    %v839 = vpack.c.bf16 %v825, %v823
    %v840 = vpack.c.bf16 %v826, %v824
    %v841 = vpack.c.bf16 %v829, %v827
    %v842 = vpack.c.bf16 %v830, %v828
    %v843 = vld [vmem:[%s8] sm:$0xff]
    %v844 = vld [vmem:[%s8 + $0x8] sm:$0xff]
    %v845 = vld [vmem:[%s8 + $0x10] sm:$0xff]
    %v846 = vld [vmem:[%s8 + $0x18] sm:$0xff]
    %848 = vset.pattern.permute.xlu0 0
    %849 = vperm.xlu0 %848, %v843
    %v850 = vpop.permute.xlu0 %849
    %853 = vset.pattern.permute.xlu0 0
    %854 = vperm.xlu0 %853, %v844
    %v855 = vpop.permute.xlu0 %854
    %858 = vset.pattern.permute.xlu0 0
    %859 = vperm.xlu0 %858, %v845
    %v860 = vpop.permute.xlu0 %859
    %863 = vset.pattern.permute.xlu0 0
    %864 = vperm.xlu0 %863, %v846
    %v865 = vpop.permute.xlu0 %864
    %v871 = vunpack.c.l.b16 %v831
    %v872 = vunpack.c.l.b16 %v832
    %v873 = vunpack.c.l.b16 %v833
    %v874 = vunpack.c.l.b16 %v834
    %v875 = vpack.c.b16 %v872, %v871
    %v876 = vpack.c.b16 %v874, %v873
    %v878 = vsel %vm476, %v875, 0
    %v881 = vsel %vm476, %v876, 0
    %883 = vmatprep.subr.bf16.mxu0 %v836
    %884 = vmatpush1.bf16.msra.mxu0 %v835
    %885 = vmatprep.subr.bf16.mxu0 %v838
    %886 = vmatpush1.bf16.msra.mxu0 %v837
    %887 = vmatprep.subr.bf16.mxu0 %v840
    %888 = vmatpush1.bf16.msra.mxu0 %v839
    %889 = vmatprep.subr.bf16.mxu0 %v842
    %890 = vmatpush1.bf16.msra.mxu0 %v841
    %891 = vmatprep.subr.bf16.mxu0 0
    %892 = vmatpush1.bf16.msra.mxu0 0
    %893 = vmatprep.subr.bf16.mxu0 0
    %894 = vmatpush1.bf16.msra.mxu0 0
    %895 = vmatprep.subr.bf16.mxu0 0
    %896 = vmatpush1.bf16.msra.mxu0 0
    %897 = vmatprep.subr.bf16.mxu0 0
    %898 = vmatpush1.bf16.msra.mxu0 0
    %899 = vmatprep.subr.bf16.mxu0 0
    %900 = vmatpush1.bf16.msra.mxu0 0
    %901 = vmatprep.subr.bf16.mxu0 0
    %902 = vmatpush1.bf16.msra.mxu0 0
    %903 = vmatprep.subr.bf16.mxu0 0
    %904 = vmatpush1.bf16.msra.mxu0 0
    %905 = vmatprep.subr.bf16.mxu0 0
    %906 = vmatpush1.bf16.msra.mxu0 0
    %907 = vmatprep.subr.bf16.mxu0 0
    %908 = vmatpush1.bf16.msra.mxu0 0
    %909 = vmatprep.subr.bf16.mxu0 0
    %910 = vmatpush1.bf16.msra.mxu0 0
    %911 = vmatprep.subr.bf16.mxu0 0
    %912 = vmatpush1.bf16.msra.mxu0 0
    %913 = vmatprep.subr.bf16.mxu0 0
    %914 = vmatpush1.bf16.msra.mxu0 0
    %915 = vmatprep.mubr.bf16.mxu0 0
    %916 = vmatmul.mubr.bf16.gmra.mrb[0].mxu0 %v878
    %v917 = vpop.f32.mrb[0].mxu0
    %v918 = vadd.f32 %v850, %v917
    %v919 = vpop.f32.mrb[0].mxu0
    %v920 = vadd.f32 %v850, %v919
    %v921 = vpop.f32.mrb[0].mxu0
    %v922 = vadd.f32 %v855, %v921
    %v923 = vpop.f32.mrb[0].mxu0
    %v924 = vadd.f32 %v855, %v923
    %925 = vmatprep.mubr.bf16.mxu0 0
    %926 = vmatmul.mubr.bf16.gmra.mrb[0].mxu0 %v881
    %v927 = vpop.f32.mrb[0].mxu0
    %v928 = vadd.f32 %v860, %v927
    %v929 = vpop.f32.mrb[0].mxu0
    %v930 = vadd.f32 %v860, %v929
    %v931 = vpop.f32.mrb[0].mxu0
    %v932 = vadd.f32 %v865, %v931
    %v933 = vpop.f32.mrb[0].mxu0
    %v934 = vadd.f32 %v865, %v933
    %935 = vdwg.mxu0
    %v936 = vmax.f32 %v918, 0.0
    %v937 = vmax.f32 %v920, 0.0
    %v938 = vmax.f32 %v922, 0.0
    %v939 = vmax.f32 %v924, 0.0
    %v940 = vmax.f32 %v928, 0.0
    %v941 = vmax.f32 %v930, 0.0
    %v942 = vmax.f32 %v932, 0.0
    %v943 = vmax.f32 %v934, 0.0
    %v944 = vld [vmem:[%s9] sm:$0x1]
    %v945 = vpack.c.bf16 %v938, %v936
    %v946 = vpack.c.bf16 %v939, %v937
    %v947 = vpack.c.bf16 %v942, %v940
    %v948 = vpack.c.bf16 %v943, %v941
    %v949 = vld [vmem:[#allocation2] sm:$0x1]
    %951 = vset.pattern.permute.xlu0 0
    %952 = vperm.xlu0 %951, %v949
    %v953 = vpop.permute.xlu0 %952
    %v955 = vlaneseq
    %v956 = vshrl.u32 %v955, 7
    %v957 = vsub.s32 0, %v956
    %v958 = vrot.slane %v953, %v957
    %vm959 = vcmask 261120
    %v961 = vsel %vm959, %v944, 0
    %963 = vmatprep.subr.bf16.mxu0 %v946
    %964 = vmatpush1.bf16.msra.mxu0 %v945
    %965 = vmatprep.subr.bf16.mxu0 %v948
    %966 = vmatpush1.bf16.msra.mxu0 %v947
    %967 = vmatprep.subr.bf16.mxu0 0
    %968 = vmatpush1.bf16.msra.mxu0 0
    %969 = vmatprep.subr.bf16.mxu0 0
    %970 = vmatpush1.bf16.msra.mxu0 0
    %971 = vmatprep.subr.bf16.mxu0 0
    %972 = vmatpush1.bf16.msra.mxu0 0
    %973 = vmatprep.subr.bf16.mxu0 0
    %974 = vmatpush1.bf16.msra.mxu0 0
    %975 = vmatprep.subr.bf16.mxu0 0
    %976 = vmatpush1.bf16.msra.mxu0 0
    %977 = vmatprep.subr.bf16.mxu0 0
    %978 = vmatpush1.bf16.msra.mxu0 0
    %979 = vmatprep.subr.bf16.mxu0 0
    %980 = vmatpush1.bf16.msra.mxu0 0
    %981 = vmatprep.subr.bf16.mxu0 0
    %982 = vmatpush1.bf16.msra.mxu0 0
    %983 = vmatprep.subr.bf16.mxu0 0
    %984 = vmatpush1.bf16.msra.mxu0 0
    %985 = vmatprep.subr.bf16.mxu0 0
    %986 = vmatpush1.bf16.msra.mxu0 0
    %987 = vmatprep.subr.bf16.mxu0 0
    %988 = vmatpush1.bf16.msra.mxu0 0
    %989 = vmatprep.subr.bf16.mxu0 0
    %990 = vmatpush1.bf16.msra.mxu0 0
    %991 = vmatprep.subr.bf16.mxu0 0
    %992 = vmatpush1.bf16.msra.mxu0 0
    %993 = vmatprep.subr.bf16.mxu0 0
    %994 = vmatpush1.bf16.msra.mxu0 0
    %995 = vmatprep.mubr.bf16.mxu0 0
    %996 = vmatmul.mubr.bf16.gmra.mrb[0].mxu0 %v961
    %v997 = vpop.f32.mrb[0].mxu0
    %v998 = vadd.f32 %v958, %v997
    %v999 = vpop.f32.mrb[0].mxu0
    %v1000 = vadd.f32 %v958, %v999
    %v1001 = vpop.f32.mrb[0].mxu0
    %v1002 = vpop.f32.mrb[0].mxu0
    %1003 = vdwg.mxu0
    %v1006 = vcombine.low %v998, %v1000
    %v1008 = vunpack.c.l.s4 1966171168
    %v1009 = vunpack.c.0.s8 %v1008
    %v1010 = vlaneseq
    %v1011 = vshrl.u32 %v1010, 7
    %v1012 = vsub.s32 %v1009, %v1011
    %v1013 = vrot.slane %v1006, %v1012
    %v1015 = vunpack.c.l.s4 1966171168
    %v1016 = vunpack.c.0.s8 %v1015
    %v1017 = vlaneseq
    %v1018 = vshrl.u32 %v1017, 7
    %v1019 = vsub.s32 %v1016, %v1018
    %v1020 = vrot.slane %v1013, %v1019
    %v1022 = vlaneseq
    %vm1023 = vcmp.ge.s32.totalorder %v1022, 0
    %vm1024 = vcmp.lt.s32.totalorder %v1022, 256
    %vm1025 = vmand %vm1023, %vm1024
    %1026 = vst.msk [vmem:[#allocation3] sm:$0x3] %vm1025, %v1020
    // Predicated region
    $region46: #{tpu_custom_call.1} parent=1 // pred_check
      _
    $region47: #{tpu_custom_call.1} parent=1 // pred_check_branch
      %1028 = sbr.rel (0) target = $region49
    $region48: #{tpu_custom_call.1} parent=1 // pred_region
      %s1030 = ssub.s32 32, 32
      %1031 = vsyncadd [#allocation4], %s1030
      %s1033 = sshll.u32 [#allocation3], 4
      %s1034 = int_to_ptr.vmem [resolvable:$true] %s1033
      %1036 = dma.vmem_to_hbm [thread:$0]  %s1034, 32, %s11, [#allocation4]
    $region49: #{tpu_custom_call.1} parent=1 // pred_fallthru
      _
    // Predicated region
    $region50: #{tpu_custom_call.1} parent=1 // pred_check
      _
    $region51: #{tpu_custom_call.1} parent=1 // pred_check_branch
      %1038 = sbr.rel (0) target = $region53
    $region52: #{tpu_custom_call.1} parent=1 // pred_region
      %1039 = dma.done [#allocation4], 32
    $region53: #{tpu_custom_call.1} parent=1 // pred_fallthru
      _
    %1040 = vsyncpa [#allocation4], 1

</llo_original>
